<compile_context>
chip_gen: v5e
topology: v5e:2x2
jax: 0.10.0
libtpu: 0.0.40
codegen_flags: <defaults>
</compile_context>

<pallas_src>
import functools

import jax
import jax.numpy as jnp
from jax.experimental import pallas as pl
from jax.experimental.pallas import tpu as pltpu


def _conv1d_k1_p1_kernel(w_ref, b_ref, x_ref, o_ref, *, n_batch, c_in, c_out):
    """Single-invocation fused Conv1d (kernel_size=1, stride=1, padding=1).

    w_ref: (C_out*C_in,)   f32 in SMEM (flat scalar table)
    b_ref: (C_out,)        f32 in SMEM
    x_ref: (N*C_in,  L)    f32 in VMEM (whole problem, one slab, L on lanes)
    o_ref: (N*C_out, L+2)  f32 in VMEM
    """
    _, L = x_ref.shape
    r_out, lp = o_ref.shape

    x = x_ref[...]  # single slab load — fits in one vreg

    # (1) Bias prefill of the entire output slab with ONE aligned full-width
    #     store.  The zero-padded boundary columns (lane 0 and lane Lp-1) see
    #     only zeros, so they are final (== bias) after this store.
    row = jax.lax.broadcasted_iota(jnp.int32, (r_out, lp), 0)
    bias_slab = jnp.zeros((r_out, lp), jnp.float32)
    for co in range(c_out):                      # static unroll, C_out = 2
        bias_slab = jnp.where(row % c_out == co, b_ref[co], bias_slab)
    o_ref[...] = bias_slab

    # (2) Interior positions:
    #     out[n*C_out+co, 1:L+1] = sum_ci w[co,ci] * x[n*C_in+ci, :] + b[co]
    #     Pure VPU broadcast-FMAs (4 MACs/position) — MXU skipped on purpose.
    for n in range(n_batch):                     # static unroll, N = 2
        for co in range(c_out):                  # static unroll, C_out = 2
            acc = jnp.full((1, L), b_ref[co], jnp.float32)
            for ci in range(c_in):               # static unroll, C_in = 2
                acc = acc + w_ref[co * c_in + ci] * x[n * c_in + ci:n * c_in + ci + 1, :]
            r = n * c_out + co
            o_ref[r:r + 1, 1:L + 1] = acc


def conv1d_k1_p1(x_ncl, weight, bias):
    """Conv1d, kernel_size=1, stride=1, padding=1.

    x_ncl:  (N, C_in, L)      float32
    weight: (C_out, C_in, 1)  float32  (PyTorch Conv1d weight layout)
    bias:   (C_out,)          float32
    returns (N, C_out, L + 2) float32
    """
    N, C_in, L = x_ncl.shape
    C_out = weight.shape[0]
    Lp = L + 2

    w_flat = weight.reshape(C_out * C_in)        # 1-D SMEM scalar table
    x2d = x_ncl.reshape(N * C_in, L)             # zero-copy view

    kernel = functools.partial(
        _conv1d_k1_p1_kernel, n_batch=N, c_in=C_in, c_out=C_out)

    out2d = pl.pallas_call(
        kernel,
        out_shape=jax.ShapeDtypeStruct((N * C_out, Lp), jnp.float32),
        # No grid: single invocation, whole-array blocks.
        in_specs=[
            pl.BlockSpec(memory_space=pltpu.MemorySpace.SMEM),   # weights
            pl.BlockSpec(memory_space=pltpu.MemorySpace.SMEM),   # bias
            pl.BlockSpec(memory_space=pltpu.MemorySpace.VMEM),   # x slab
        ],
        out_specs=pl.BlockSpec(memory_space=pltpu.MemorySpace.VMEM),
    )(w_flat, bias, x2d)

    return out2d.reshape(N, C_out, Lp)           # zero-copy view


if __name__ == "__main__":
    key = jax.random.PRNGKey(0)
    k_x, k_w, k_b = jax.random.split(key, 3)

    N, C_in, C_out, L = 2, 2, 2, 8
    x = jax.random.normal(k_x, (N, C_in, L), dtype=jnp.float32)

    # Deterministic parameter init (mimic PyTorch uniform(-1/sqrt(fan_in), +)).
    fan_in = C_in * 1
    bound = 1.0 / (fan_in ** 0.5)
    weight = jax.random.uniform(k_w, (C_out, C_in, 1), jnp.float32, -bound, bound)
    bias = jax.random.uniform(k_b, (C_out,), jnp.float32, -bound, bound)

    out = conv1d_k1_p1(x, weight, bias)
    out = jax.block_until_ready(out)

    # Plain-JAX reference for sanity.
    xp = jnp.pad(x, ((0, 0), (0, 0), (1, 1)))
    ref = jnp.einsum("oc,ncl->nol", weight[:, :, 0], xp) + bias[None, :, None]
    assert out.shape == (N, C_out, L + 2)
    assert jnp.allclose(out, ref, atol=1e-5, rtol=1e-5)

    print("KERNEL_OK")
</pallas_src>

<mosaic_0001>
module attributes {stable_mosaic.version = 11 : i64} {
  func.func @_conv1d_k1_p1_kernel(%arg0: memref<4xf32, #tpu.memory_space<smem>>, %arg1: memref<2xf32, #tpu.memory_space<smem>>, %arg2: memref<4x8xf32, #tpu.memory_space<vmem>>, %arg3: memref<4x10xf32, #tpu.memory_space<vmem>>) attributes {dimension_semantics = [], scalar_prefetch = 0 : i64, scratch_operands = 0 : i64, tpu.core_type = #tpu.core_type<tc>} {
    %c0 = arith.constant 0 : index
    %c0_0 = arith.constant 0 : index
    %0 = vector.load %arg2[%c0, %c0_0] : memref<4x8xf32, #tpu.memory_space<vmem>>, vector<4x8xf32>
    %1 = tpu.iota {dimensions = array<i32: 0>} : vector<4x10xi32>
    %cst = arith.constant 0.000000e+00 : f32
    %2 = vector.broadcast %cst : f32 to vector<4x10xf32>
    %c2_i32 = arith.constant 2 : i32
    %c0_i32 = arith.constant 0 : i32
    %3 = arith.cmpi eq, %c2_i32, %c0_i32 : i32
    %c1_i32 = arith.constant 1 : i32
    %4 = arith.select %3, %c1_i32, %c2_i32 : i32
    %5 = vector.broadcast %4 : i32 to vector<4x10xi32>
    %6 = arith.remsi %1, %5 : vector<4x10xi32>
    %c0_i32_1 = arith.constant 0 : i32
    %7 = vector.broadcast %c0_i32_1 : i32 to vector<4x10xi32>
    %8 = arith.cmpi ne, %6, %7 : vector<4x10xi32>
    %c0_i32_2 = arith.constant 0 : i32
    %9 = vector.broadcast %c0_i32_2 : i32 to vector<4x10xi32>
    %10 = arith.cmpi slt, %6, %9 : vector<4x10xi32>
    %c0_i32_3 = arith.constant 0 : i32
    %11 = arith.cmpi slt, %4, %c0_i32_3 : i32
    %12 = vector.broadcast %11 : i1 to vector<4x10xi1>
    %13 = vector.broadcast %12 : vector<4x10xi1> to vector<4x10xi1>
    %14 = arith.xori %10, %13 : vector<4x10xi1>
    %15 = arith.andi %14, %8 : vector<4x10xi1>
    %16 = vector.broadcast %4 : i32 to vector<4x10xi32>
    %17 = arith.addi %6, %16 : vector<4x10xi32>
    %18 = arith.select %15, %17, %6 : vector<4x10xi1>, vector<4x10xi32>
    %c0_i32_4 = arith.constant 0 : i32
    %19 = vector.broadcast %c0_i32_4 : i32 to vector<4x10xi32>
    %20 = arith.cmpi eq, %18, %19 : vector<4x10xi32>
    %c0_5 = arith.constant 0 : index
    %21 = memref.load %arg1[%c0_5] : memref<2xf32, #tpu.memory_space<smem>>
    %22 = vector.broadcast %21 : f32 to vector<4x10xf32>
    %23 = arith.select %20, %22, %2 : vector<4x10xi1>, vector<4x10xf32>
    %c2_i32_6 = arith.constant 2 : i32
    %c0_i32_7 = arith.constant 0 : i32
    %24 = arith.cmpi eq, %c2_i32_6, %c0_i32_7 : i32
    %c1_i32_8 = arith.constant 1 : i32
    %25 = arith.select %24, %c1_i32_8, %c2_i32_6 : i32
    %26 = vector.broadcast %25 : i32 to vector<4x10xi32>
    %27 = arith.remsi %1, %26 : vector<4x10xi32>
    %c0_i32_9 = arith.constant 0 : i32
    %28 = vector.broadcast %c0_i32_9 : i32 to vector<4x10xi32>
    %29 = arith.cmpi ne, %27, %28 : vector<4x10xi32>
    %c0_i32_10 = arith.constant 0 : i32
    %30 = vector.broadcast %c0_i32_10 : i32 to vector<4x10xi32>
    %31 = arith.cmpi slt, %27, %30 : vector<4x10xi32>
    %c0_i32_11 = arith.constant 0 : i32
    %32 = arith.cmpi slt, %25, %c0_i32_11 : i32
    %33 = vector.broadcast %32 : i1 to vector<4x10xi1>
    %34 = vector.broadcast %33 : vector<4x10xi1> to vector<4x10xi1>
    %35 = arith.xori %31, %34 : vector<4x10xi1>
    %36 = arith.andi %35, %29 : vector<4x10xi1>
    %37 = vector.broadcast %25 : i32 to vector<4x10xi32>
    %38 = arith.addi %27, %37 : vector<4x10xi32>
    %39 = arith.select %36, %38, %27 : vector<4x10xi1>, vector<4x10xi32>
    %c1_i32_12 = arith.constant 1 : i32
    %40 = vector.broadcast %c1_i32_12 : i32 to vector<4x10xi32>
    %41 = arith.cmpi eq, %39, %40 : vector<4x10xi32>
    %c1 = arith.constant 1 : index
    %42 = memref.load %arg1[%c1] : memref<2xf32, #tpu.memory_space<smem>>
    %43 = vector.broadcast %42 : f32 to vector<4x10xf32>
    %44 = arith.select %41, %43, %23 : vector<4x10xi1>, vector<4x10xf32>
    %c0_13 = arith.constant 0 : index
    %c0_14 = arith.constant 0 : index
    %45 = vector.load %arg3[%c0_13, %c0_14] : memref<4x10xf32, #tpu.memory_space<vmem>>, vector<4x10xf32>
    tpu.vector_store %arg3[%c0_13, %c0_14], %44 {strides = array<i32>} : memref<4x10xf32, #tpu.memory_space<vmem>>, vector<4x10xf32>,
    %c0_15 = arith.constant 0 : index
    %46 = memref.load %arg1[%c0_15] : memref<2xf32, #tpu.memory_space<smem>>
    %47 = vector.broadcast %46 : f32 to vector<1x8xf32>
    %c0_16 = arith.constant 0 : index
    %48 = memref.load %arg0[%c0_16] : memref<4xf32, #tpu.memory_space<smem>>
    %49 = vector.extract_strided_slice %0 {offsets = [0, 0], sizes = [1, 8], strides = [1, 1]} : vector<4x8xf32> to vector<1x8xf32>
    %50 = vector.broadcast %48 : f32 to vector<1x8xf32>
    %51 = arith.mulf %50, %49 : vector<1x8xf32>
    %52 = arith.addf %47, %51 : vector<1x8xf32>
    %c1_17 = arith.constant 1 : index
    %53 = memref.load %arg0[%c1_17] : memref<4xf32, #tpu.memory_space<smem>>
    %54 = vector.extract_strided_slice %0 {offsets = [1, 0], sizes = [1, 8], strides = [1, 1]} : vector<4x8xf32> to vector<1x8xf32>
    %55 = vector.broadcast %53 : f32 to vector<1x8xf32>
    %56 = arith.mulf %55, %54 : vector<1x8xf32>
    %57 = arith.addf %52, %56 : vector<1x8xf32>
    %c0_18 = arith.constant 0 : index
    %c1_19 = arith.constant 1 : index
    %58 = vector.load %arg3[%c0_18, %c1_19] : memref<4x10xf32, #tpu.memory_space<vmem>>, vector<1x8xf32>
    tpu.vector_store %arg3[%c0_18, %c1_19], %57 {strides = array<i32>} : memref<4x10xf32, #tpu.memory_space<vmem>>, vector<1x8xf32>,
    %c1_20 = arith.constant 1 : index
    %59 = memref.load %arg1[%c1_20] : memref<2xf32, #tpu.memory_space<smem>>
    %60 = vector.broadcast %59 : f32 to vector<1x8xf32>
    %c2 = arith.constant 2 : index
    %61 = memref.load %arg0[%c2] : memref<4xf32, #tpu.memory_space<smem>>
    %62 = vector.extract_strided_slice %0 {offsets = [0, 0], sizes = [1, 8], strides = [1, 1]} : vector<4x8xf32> to vector<1x8xf32>
    %63 = vector.broadcast %61 : f32 to vector<1x8xf32>
    %64 = arith.mulf %63, %62 : vector<1x8xf32>
    %65 = arith.addf %60, %64 : vector<1x8xf32>
    %c3 = arith.constant 3 : index
    %66 = memref.load %arg0[%c3] : memref<4xf32, #tpu.memory_space<smem>>
    %67 = vector.extract_strided_slice %0 {offsets = [1, 0], sizes = [1, 8], strides = [1, 1]} : vector<4x8xf32> to vector<1x8xf32>
    %68 = vector.broadcast %66 : f32 to vector<1x8xf32>
    %69 = arith.mulf %68, %67 : vector<1x8xf32>
    %70 = arith.addf %65, %69 : vector<1x8xf32>
    %c1_21 = arith.constant 1 : index
    %c1_22 = arith.constant 1 : index
    %71 = vector.load %arg3[%c1_21, %c1_22] : memref<4x10xf32, #tpu.memory_space<vmem>>, vector<1x8xf32>
    tpu.vector_store %arg3[%c1_21, %c1_22], %70 {strides = array<i32>} : memref<4x10xf32, #tpu.memory_space<vmem>>, vector<1x8xf32>,
    %c0_23 = arith.constant 0 : index
    %72 = memref.load %arg1[%c0_23] : memref<2xf32, #tpu.memory_space<smem>>
    %73 = vector.broadcast %72 : f32 to vector<1x8xf32>
    %c0_24 = arith.constant 0 : index
    %74 = memref.load %arg0[%c0_24] : memref<4xf32, #tpu.memory_space<smem>>
    %75 = vector.extract_strided_slice %0 {offsets = [2, 0], sizes = [1, 8], strides = [1, 1]} : vector<4x8xf32> to vector<1x8xf32>
    %76 = vector.broadcast %74 : f32 to vector<1x8xf32>
    %77 = arith.mulf %76, %75 : vector<1x8xf32>
    %78 = arith.addf %73, %77 : vector<1x8xf32>
    %c1_25 = arith.constant 1 : index
    %79 = memref.load %arg0[%c1_25] : memref<4xf32, #tpu.memory_space<smem>>
    %80 = vector.extract_strided_slice %0 {offsets = [3, 0], sizes = [1, 8], strides = [1, 1]} : vector<4x8xf32> to vector<1x8xf32>
    %81 = vector.broadcast %79 : f32 to vector<1x8xf32>
    %82 = arith.mulf %81, %80 : vector<1x8xf32>
    %83 = arith.addf %78, %82 : vector<1x8xf32>
    %c2_26 = arith.constant 2 : index
    %c1_27 = arith.constant 1 : index
    %84 = vector.load %arg3[%c2_26, %c1_27] : memref<4x10xf32, #tpu.memory_space<vmem>>, vector<1x8xf32>
    tpu.vector_store %arg3[%c2_26, %c1_27], %83 {strides = array<i32>} : memref<4x10xf32, #tpu.memory_space<vmem>>, vector<1x8xf32>,
    %c1_28 = arith.constant 1 : index
    %85 = memref.load %arg1[%c1_28] : memref<2xf32, #tpu.memory_space<smem>>
    %86 = vector.broadcast %85 : f32 to vector<1x8xf32>
    %c2_29 = arith.constant 2 : index
    %87 = memref.load %arg0[%c2_29] : memref<4xf32, #tpu.memory_space<smem>>
    %88 = vector.extract_strided_slice %0 {offsets = [2, 0], sizes = [1, 8], strides = [1, 1]} : vector<4x8xf32> to vector<1x8xf32>
    %89 = vector.broadcast %87 : f32 to vector<1x8xf32>
    %90 = arith.mulf %89, %88 : vector<1x8xf32>
    %91 = arith.addf %86, %90 : vector<1x8xf32>
    %c3_30 = arith.constant 3 : index
    %92 = memref.load %arg0[%c3_30] : memref<4xf32, #tpu.memory_space<smem>>
    %93 = vector.extract_strided_slice %0 {offsets = [3, 0], sizes = [1, 8], strides = [1, 1]} : vector<4x8xf32> to vector<1x8xf32>
    %94 = vector.broadcast %92 : f32 to vector<1x8xf32>
    %95 = arith.mulf %94, %93 : vector<1x8xf32>
    %96 = arith.addf %91, %95 : vector<1x8xf32>
    %c3_31 = arith.constant 3 : index
    %c1_32 = arith.constant 1 : index
    %97 = vector.load %arg3[%c3_31, %c1_32] : memref<4x10xf32, #tpu.memory_space<vmem>>, vector<1x8xf32>
    tpu.vector_store %arg3[%c3_31, %c1_32], %96 {strides = array<i32>} : memref<4x10xf32, #tpu.memory_space<vmem>>, vector<1x8xf32>,
    return
  }
}

</mosaic_0001>

<llo_original>
// kernel: tpu_custom_call.1
$region0: #{tpu_custom_call.1}
  #allocation0 [shape = 'u32[]', space=smem, size = 0x4, offset = 0x4, fixed_abs, tag = 'smem constant byte address 0x4 - core index']
  #allocation1 [shape = 'u32[72,128]{1,0:T(1,128)}', space=vmem, size = 0x9000, scoped, tag = 'internal scratch']
  %s0 = inlined_call_operand.hbm [shape: f32[4], index: 0, kind: input, shape index: {}]
  %s1 = inlined_call_operand.hbm [shape: f32[2], index: 1, kind: input, shape index: {}]
  %s2 = inlined_call_operand.hbm [shape: f32[4,8], index: 2, kind: input, shape index: {}]
  %s3 = inlined_call_operand.hbm [shape: f32[4,10], index: 3, kind: output, shape index: {}]
  %s4 = sld [smem:[#allocation0]]
  $region34: #{tpu_custom_call.1} parent=0
    _
  %s6 = ssub.s32 1, %s4
  %s7 = scalar_select 0, %s6, %s4
  $region1: #{tpu_custom_call.1} parent=0
    #allocation2 [shape = 'u8[512]{0}', space=smem, size = 0x200, scoped, tag = 'input window, operand 0, single buffered']
    #allocation3 [shape = 's32[1]{0}', space=sflag, size = 0x4, scoped, tag = 'scoped memory for tpu_custom_call.1']
    #allocation4 [shape = 's32[1]{0}', space=sflag, size = 0x4, scoped, tag = 'scoped memory for tpu_custom_call.1']
    #allocation5 [shape = 's32[1]{0}', space=sflag, size = 0x4, scoped, tag = 'scoped memory for tpu_custom_call.1']
    #allocation6 [shape = 'u8[512]{0}', space=smem, size = 0x200, scoped, tag = 'input window, operand 1, single buffered']
    #allocation7 [shape = 's32[1]{0}', space=sflag, size = 0x4, scoped, tag = 'scoped memory for tpu_custom_call.1']
    #allocation8 [shape = 'u8[2048]{0}', space=vmem, size = 0x800, scoped, tag = 'input window, operand 2, single buffered']
    #allocation9 [shape = 'u8[2048]{0}', space=vmem, size = 0x800, scoped, tag = 'output window, operand 0, single buffered']
    %8 = vsyncpa [#allocation5], 0
    %9 = vsyncpa [#allocation7], 0
    %10 = vsyncpa [#allocation3], 0
    %11 = vsyncpa [#allocation4], 0
    // Predicated region
    $region2: #{tpu_custom_call.1} parent=1 // pred_check
      _
    $region3: #{tpu_custom_call.1} parent=1 // pred_check_branch
      %13 = sbr.rel (0) target = $region5
    $region4: #{tpu_custom_call.1} parent=1 // pred_region
      %15 = vsyncadd [#allocation5], 0
      %s17 = sshll.u32 %s0, 4
      %s18 = int_to_ptr.hbm [resolvable:$true] %s17
      %20 = dma.hbm_to_smem %s18, 16, [#allocation2], [#allocation5]
    $region5: #{tpu_custom_call.1} parent=1 // pred_fallthru
      _
    // Predicated region
    $region6: #{tpu_custom_call.1} parent=1 // pred_check
      _
    $region7: #{tpu_custom_call.1} parent=1 // pred_check_branch
      %22 = sbr.rel (0) target = $region9
    $region8: #{tpu_custom_call.1} parent=1 // pred_region
      %24 = vsyncadd [#allocation7], 0
      %s26 = sshll.u32 %s1, 4
      %s27 = int_to_ptr.hbm [resolvable:$true] %s26
      %29 = dma.hbm_to_smem %s27, 16, [#allocation6], [#allocation7]
    $region9: #{tpu_custom_call.1} parent=1 // pred_fallthru
      _
    // Predicated region
    $region10: #{tpu_custom_call.1} parent=1 // pred_check
      _
    $region11: #{tpu_custom_call.1} parent=1 // pred_check_branch
      %31 = sbr.rel (0) target = $region13
    $region12: #{tpu_custom_call.1} parent=1 // pred_region
      %33 = vsyncadd [#allocation3], 0
      %s35 = sshll.u32 %s2, 4
      %s36 = int_to_ptr.hbm [resolvable:$true] %s35
      %s37 = sshll.u32 [#allocation8], 4
      %s38 = int_to_ptr.vmem [resolvable:$true] %s37
      %40 = dma.hbm_to_vmem [thread:$0]  %s36, 64, %s38, [#allocation3]
    $region13: #{tpu_custom_call.1} parent=1 // pred_fallthru
      _
    // Predicated region
    $region14: #{tpu_custom_call.1} parent=1 // pred_check
      _
    $region15: #{tpu_custom_call.1} parent=1 // pred_check_branch
      %42 = sbr.rel (0) target = $region17
    $region16: #{tpu_custom_call.1} parent=1 // pred_region
      %44 = dma.done [#allocation5], 16
    $region17: #{tpu_custom_call.1} parent=1 // pred_fallthru
      _
    // Predicated region
    $region18: #{tpu_custom_call.1} parent=1 // pred_check
      _
    $region19: #{tpu_custom_call.1} parent=1 // pred_check_branch
      %46 = sbr.rel (0) target = $region21
    $region20: #{tpu_custom_call.1} parent=1 // pred_region
      %48 = dma.done [#allocation7], 16
    $region21: #{tpu_custom_call.1} parent=1 // pred_fallthru
      _
    // Predicated region
    $region22: #{tpu_custom_call.1} parent=1 // pred_check
      _
    $region23: #{tpu_custom_call.1} parent=1 // pred_check_branch
      %50 = sbr.rel (0) target = $region25
    $region24: #{tpu_custom_call.1} parent=1 // pred_region
      %52 = dma.done [#allocation3], 64
    $region25: #{tpu_custom_call.1} parent=1 // pred_fallthru
      _
    %53 = sfence
    %v54 = vld [vmem:[#allocation8] sm:$0xf]
    %v55 = vlaneseq
    %v56 = vshrl.u32 %v55, 7
    %vm57 = vcmp.lt.s32.totalorder %v56, 0
    %v58 = vsub.s32 0, %v56
    %v59 = vsel %vm57, %v58, %v56
    %v60 = vshrl.u32 %v59, 1
    %v61 = vand.u32 %v59, 1
    %v62 = vsub.s32 0, %v61
    %v63 = vsel %vm57, %v62, %v61
    %vm64 = vcmp.ne.s32.totalorder %v63, 0
    %vm65 = vcmp.lt.s32.totalorder %v63, 0
    %vm66 = vmand %vm65, %vm64
    %v67 = vadd.s32 %v63, 2
    %v68 = vsel %vm66, %v67, %v63
    %vm69 = vcmp.eq.s32.totalorder %v68, 0
    %s70 = sld [smem:[#allocation6]]
    %v71 = vstv %s70
    %v72 = vsel %vm69, %v71, 0.0
    %vm73 = vcmp.eq.s32.totalorder %v68, 1
    %s74 = sld [smem:[#allocation6 + $0x1]]
    %v75 = vstv %s74
    %v76 = vsel %vm73, %v75, %v72
    %vm77 = vcmask 76800
    %78 = vst.msk [vmem:[#allocation9] sm:$0xf] %vm77, %v76
    %s79 = sld [smem:[#allocation6]]
    %v80 = vstv %s79
    %s81 = sld [smem:[#allocation2]]
    %v82 = vstv %s81
    %v83 = vmul.f32 %v82, %v54
    %v84 = vadd.f32 %v80, %v83
    %s85 = sld [smem:[#allocation2 + $0x1]]
    %v86 = vstv %s85
    %v87 = vmul.f32 %v86, %v54
    %v89 = vrot.slane %v87, 1
    %v91 = vadd.f32 %v84, %v89
    %93 = vrot.lane.b32.xlu0 %v91, 1
    %v94 = vpop.permute.xlu0 %93
    %vm96 = vcmask 65544
    %97 = vst.msk [vmem:[#allocation9] sm:$0x1] %vm96, %v94
    %s98 = sld [smem:[#allocation6 + $0x1]]
    %v99 = vstv %s98
    %s100 = sld [smem:[#allocation2 + $0x2]]
    %v101 = vstv %s100
    %v102 = vmul.f32 %v101, %v54
    %v103 = vadd.f32 %v99, %v102
    %s104 = sld [smem:[#allocation2 + $0x3]]
    %v105 = vstv %s104
    %v106 = vmul.f32 %v105, %v54
    %v108 = vrot.slane %v106, 1
    %v110 = vadd.f32 %v103, %v108
    %112 = vrot.lane.b32.xlu0 %v110, 1
    %v113 = vpop.permute.xlu0 %112
    %115 = vst.msk [vmem:[#allocation9 + $0x1] sm:$0x1] %vm96, %v113
    %s116 = sld [smem:[#allocation6]]
    %v117 = vstv %s116
    %s118 = sld [smem:[#allocation2]]
    %v119 = vstv %s118
    %v120 = vmul.f32 %v119, %v54
    %v121 = vadd.f32 %v117, %v120
    %s122 = sld [smem:[#allocation2 + $0x1]]
    %v123 = vstv %s122
    %v124 = vmul.f32 %v123, %v54
    %v126 = vrot.slane %v124, 1
    %v128 = vadd.f32 %v121, %v126
    %130 = vrot.lane.b32.xlu0 %v128, 1
    %v131 = vpop.permute.xlu0 %130
    %vm133 = vcmask 67594
    %134 = vst.msk [vmem:[#allocation9] sm:$0x4] %vm133, %v131
    %s135 = sld [smem:[#allocation6 + $0x1]]
    %v136 = vstv %s135
    %s137 = sld [smem:[#allocation2 + $0x2]]
    %v138 = vstv %s137
    %v139 = vmul.f32 %v138, %v54
    %v140 = vadd.f32 %v136, %v139
    %s141 = sld [smem:[#allocation2 + $0x3]]
    %v142 = vstv %s141
    %v143 = vmul.f32 %v142, %v54
    %v145 = vrot.slane %v143, 1
    %v147 = vadd.f32 %v140, %v145
    %149 = vrot.lane.b32.xlu0 %v147, 1
    %v150 = vpop.permute.xlu0 %149
    %152 = vst.msk [vmem:[#allocation9 + $0x1] sm:$0x4] %vm133, %v150
    // Predicated region
    $region26: #{tpu_custom_call.1} parent=1 // pred_check
      _
    $region27: #{tpu_custom_call.1} parent=1 // pred_check_branch
      %154 = sbr.rel (0) target = $region29
    $region28: #{tpu_custom_call.1} parent=1 // pred_region
      %156 = vsyncadd [#allocation4], 0
      %s158 = sshll.u32 [#allocation9], 4
      %s159 = int_to_ptr.vmem [resolvable:$true] %s158
      %s160 = sshll.u32 %s3, 4
      %s161 = int_to_ptr.hbm [resolvable:$true] %s160
      %163 = dma.vmem_to_hbm [thread:$0]  %s159, 64, %s161, [#allocation4]
    $region29: #{tpu_custom_call.1} parent=1 // pred_fallthru
      _
    // Predicated region
    $region30: #{tpu_custom_call.1} parent=1 // pred_check
      _
    $region31: #{tpu_custom_call.1} parent=1 // pred_check_branch
      %165 = sbr.rel (0) target = $region33
    $region32: #{tpu_custom_call.1} parent=1 // pred_region
      %167 = dma.done [#allocation4], 64
    $region33: #{tpu_custom_call.1} parent=1 // pred_fallthru
      _
    %168 = vsyncpa [#allocation3], 1
    %169 = vsyncpa [#allocation4], 1
    %170 = vsyncpa [#allocation5], 1
    %171 = vsyncpa [#allocation7], 1

</llo_original>
